<compile_context>
chip_gen: v7x
topology: tpu7x:2x2x1
jax: 0.10.0
libtpu: 0.0.40
codegen_flags: <defaults>
</compile_context>

<pallas_src>
import jax
import jax.numpy as jnp
from jax.experimental import pallas as pl
from jax.experimental.pallas import tpu as pltpu


# ---------------------------------------------------------------------------
# Kernel
# ---------------------------------------------------------------------------
def _sigmoid_kernel(x_ref, o_ref):
    # Elementwise sigmoid on the whole VMEM tile (EUP exp + VPU).
    o_ref[...] = jax.nn.sigmoid(x_ref[...])


# ---------------------------------------------------------------------------
# Tiling helpers
# ---------------------------------------------------------------------------
def _round_up(x, m):
    return ((x + m - 1) // m) * m


def _sublane_multiple(dtype):
    # f32 -> 8, bf16/f16 -> 16, int8/fp8 -> 32 (sub-32-bit packs along sublanes).
    itemsize = jnp.dtype(dtype).itemsize
    return max(8, 32 // max(1, itemsize))


def _pick_tiles(rows, cols, dtype, target_block_bytes):
    """Pick a (tile_rows, tile_cols) block that is (sublane,128)-aligned and
    whose bytes stay under target_block_bytes (per array, per buffer)."""
    itemsize = jnp.dtype(dtype).itemsize
    sub = _sublane_multiple(dtype)

    # Lane (last) dim: multiple of 128 for unmasked lane-dense vst; cap the
    # width so we can also grow rows and keep the grid 2D for big inputs.
    cols_padded = _round_up(cols, 128)
    tile_cols = min(cols_padded, 2048)

    # Sublane dim: fill the remaining VMEM budget with rows.
    rows_budget = max(sub, target_block_bytes // (tile_cols * itemsize))
    rows_budget = max(sub, (rows_budget // sub) * sub)
    rows_padded = _round_up(rows, sub)
    tile_rows = min(rows_padded, rows_budget)
    return tile_rows, tile_cols


# ---------------------------------------------------------------------------
# Pallas wrapper: elementwise sigmoid over a 2D view
# ---------------------------------------------------------------------------
def sigmoid_pallas_2d(x2d, *, target_block_bytes=4 * 1024 * 1024):
    R, C = x2d.shape
    tile_rows, tile_cols = _pick_tiles(R, C, x2d.dtype, target_block_bytes)
    grid = (pl.cdiv(R, tile_rows), pl.cdiv(C, tile_cols))

    # Double-buffered input + output = 4 x block_bytes; give generous headroom
    # but stay safely under v7x's 64 MiB physical VMEM.
    block_bytes = tile_rows * tile_cols * jnp.dtype(x2d.dtype).itemsize
    vmem_limit = int(min(48 * 1024 * 1024, max(32 * 1024 * 1024, 6 * block_bytes)))

    return pl.pallas_call(
        _sigmoid_kernel,
        out_shape=jax.ShapeDtypeStruct((R, C), x2d.dtype),
        grid_spec=pltpu.PrefetchScalarGridSpec(
            num_scalar_prefetch=0,
            grid=grid,
            in_specs=[pl.BlockSpec((tile_rows, tile_cols), lambda i, j: (i, j))],
            out_specs=pl.BlockSpec((tile_rows, tile_cols), lambda i, j: (i, j)),
        ),
        compiler_params=pltpu.CompilerParams(
            # Both grid axes are independent -> megacore sharding on v7x.
            dimension_semantics=("parallel", "parallel"),
            vmem_limit_bytes=vmem_limit,
        ),
    )(x2d)


# ---------------------------------------------------------------------------
# Module forward: unsqueeze(sigmoid(x), dim=1)
# ---------------------------------------------------------------------------
_PALLAS_MIN_ELEMENTS = 1 << 15  # below this, pallas_call launch overhead dominates


def unsqueeze_forward(x, *, force_pallas=False):
    """Equivalent of torch.unsqueeze(torch.sigmoid(x), dim=1).

    x: (N, C, H, W)  ->  out: (N, 1, C, H, W)
    """
    N, C, H, W = x.shape
    total = N * C * H * W

    if total < _PALLAS_MIN_ELEMENTS and not force_pallas:
        # Tiny input: plain XLA fuses sigmoid + reshape; Pallas only wins when
        # the array is large enough to stream from HBM.
        return jnp.expand_dims(jax.nn.sigmoid(x), axis=1)

    x2d = x.reshape(N * C, H * W)          # lane-dense 2D view (metadata only)
    y2d = sigmoid_pallas_2d(x2d)
    # Fold the "unsqueeze(dim=1)" into a single metadata-only reshape.
    return y2d.reshape(N, 1, C, H, W)


# ---------------------------------------------------------------------------
# Demo / self-test
# ---------------------------------------------------------------------------
if __name__ == "__main__":
    key = jax.random.PRNGKey(0)

    # Primary test: small NCHW shape matching the module's expected input.
    x = jax.random.normal(key, (2, 4, 16, 16), dtype=jnp.float32)
    out = unsqueeze_forward(x, force_pallas=True)   # force Pallas to exercise kernel
    out = jax.block_until_ready(out)
    ref = jnp.expand_dims(jax.nn.sigmoid(x), axis=1)
    assert out.shape == (2, 1, 4, 16, 16), out.shape
    assert jnp.allclose(out, ref, atol=1e-6), "mismatch vs reference (f32)"

    # Secondary test: shape that does NOT divide the (8,128)-aligned block,
    # exercising pl.cdiv grid + Pallas block clamping / masked stores.
    key2 = jax.random.PRNGKey(0)
    x2 = jax.random.normal(key2, (3, 5, 12, 20), dtype=jnp.float32)
    out2 = jax.block_until_ready(unsqueeze_forward(x2, force_pallas=True))
    ref2 = jnp.expand_dims(jax.nn.sigmoid(x2), axis=1)
    assert out2.shape == (3, 1, 5, 12, 20), out2.shape
    assert jnp.allclose(out2, ref2, atol=1e-6), "mismatch vs reference (clamped blocks)"

    # bf16 test: checks the 16-row sublane-multiple tile selection.
    x3 = jax.random.normal(jax.random.PRNGKey(0), (2, 8, 16, 16), dtype=jnp.bfloat16)
    out3 = jax.block_until_ready(unsqueeze_forward(x3, force_pallas=True))
    ref3 = jnp.expand_dims(jax.nn.sigmoid(x3), axis=1)
    assert out3.shape == (2, 1, 8, 16, 16), out3.shape
    assert jnp.allclose(out3.astype(jnp.float32), ref3.astype(jnp.float32),
                        atol=1e-2), "mismatch vs reference (bf16)"

    print("KERNEL_OK")
</pallas_src>

<mosaic_0001>
module attributes {stable_mosaic.version = 11 : i64} {
  func.func @_sigmoid_kernel(%arg0: i32, %arg1: i32, %arg2: memref<8x256xf32, #tpu.memory_space<vmem>>, %arg3: memref<8x256xf32, #tpu.memory_space<vmem>>) attributes {dimension_semantics = [#tpu.dimension_semantics<parallel>, #tpu.dimension_semantics<parallel>], iteration_bounds = array<i64: 1, 1>, scalar_prefetch = 0 : i64, scratch_operands = 0 : i64, tpu.core_type = #tpu.core_type<tc>, window_params = [{transform_indices = @transform_0, window_bounds = array<i64: 8, 256>}, {transform_indices = @transform_1, window_bounds = array<i64: 8, 256>}]} {
    %c0 = arith.constant 0 : index
    %c0_0 = arith.constant 0 : index
    %0 = vector.load %arg2[%c0, %c0_0] : memref<8x256xf32, #tpu.memory_space<vmem>>, vector<8x256xf32>
    %1 = arith.negf %0 : vector<8x256xf32>
    %2 = math.exp %1 : vector<8x256xf32>
    %cst = arith.constant 1.000000e+00 : f32
    %3 = vector.broadcast %cst : f32 to vector<8x256xf32>
    %4 = arith.addf %3, %2 : vector<8x256xf32>
    %5 = arith.divf %3, %4 : vector<8x256xf32>
    %c0_1 = arith.constant 0 : index
    %c0_2 = arith.constant 0 : index
    %6 = vector.load %arg3[%c0_1, %c0_2] : memref<8x256xf32, #tpu.memory_space<vmem>>, vector<8x256xf32>
    tpu.vector_store %arg3[%c0_1, %c0_2], %5 {strides = array<i32>} : memref<8x256xf32, #tpu.memory_space<vmem>>, vector<8x256xf32>,
    return
  }
  func.func @transform_0(%arg0: i32, %arg1: i32) -> (i32, i32) {
    %c0_i32 = arith.constant 0 : i32
    return %arg0, %arg1 : i32, i32
  }
  func.func @transform_1(%arg0: i32, %arg1: i32) -> (i32, i32) {
    %c0_i32 = arith.constant 0 : i32
    return %arg0, %arg1 : i32, i32
  }
}

</mosaic_0001>

<llo_original>
// kernel: tpu_custom_call.1
$region0: #{tpu_custom_call.1}
  #allocation0 [shape = 'u32[]', space=smem, size = 0x4, offset = 0x4, fixed_abs, tag = 'smem constant byte address 0x4 - core index']
  #allocation1 [shape = 'u32[144,128]{1,0:T(1,128)}', space=vmem, size = 0x12000, scoped, tag = 'internal scratch']
  %s0 = inlined_call_operand.hbm [shape: f32[8,256], index: 0, kind: input, shape index: {}]
  %s1 = inlined_call_operand.hbm [shape: f32[8,256], index: 1, kind: output, shape index: {}]
  %s2 = sld [smem:[#allocation0]]
  $region18: #{tpu_custom_call.1} parent=0
    _
  %s4 = ssub.s32 1, %s2
  %s5 = scalar_select 0, %s4, %s2
  $region1: #{tpu_custom_call.1} parent=0
    #allocation2 [shape = 'u8[8192]{0}', space=vmem, size = 0x2000, scoped, tag = 'input window, operand 0, single buffered']
    #allocation3 [shape = 's32[1]{0}', space=sflag, size = 0x4, scoped, tag = 'scoped memory for tpu_custom_call.1']
    #allocation4 [shape = 's32[1]{0}', space=sflag, size = 0x4, scoped, tag = 'scoped memory for tpu_custom_call.1']
    #allocation5 [shape = 'u8[8192]{0}', space=vmem, size = 0x2000, scoped, tag = 'output window, operand 0, single buffered']
    %6 = vsyncpa [#allocation3], 0
    %7 = vsyncpa [#allocation4], 0
    // Predicated region
    $region2: #{tpu_custom_call.1} parent=1 // pred_check
      _
    $region3: #{tpu_custom_call.1} parent=1 // pred_check_branch
      %9 = sbr.rel (0) target = $region5
    $region4: #{tpu_custom_call.1} parent=1 // pred_region
      %s11 = ssub.s32 256, 256
      %12 = vsyncadd [#allocation3], %s11
      %s14 = sshll.u32 [#allocation2], 4
      %s15 = int_to_ptr.vmem [resolvable:$true] %s14
      %17 = dma.hbm_to_vmem [thread:$0]  %s0, 256, %s15, [#allocation3]
    $region5: #{tpu_custom_call.1} parent=1 // pred_fallthru
      _
    // Predicated region
    $region6: #{tpu_custom_call.1} parent=1 // pred_check
      _
    $region7: #{tpu_custom_call.1} parent=1 // pred_check_branch
      %19 = sbr.rel (0) target = $region9
    $region8: #{tpu_custom_call.1} parent=1 // pred_region
      %20 = dma.done [#allocation3], 256
    $region9: #{tpu_custom_call.1} parent=1 // pred_fallthru
      _
    %v21 = vld [vmem:[#allocation2] sm:$0xff]
    %v22 = vld [vmem:[#allocation2 + $0x8] sm:$0xff]
    %v23 = vxor.u32 %v21, 2147483648
    %v24 = vxor.u32 %v22, 2147483648
    %v25 = vmul.f32 %v23, 1.442695
    %v26 = vpow.pop %v25
    %v27 = vmul.f32 %v24, 1.442695
    %v28 = vpow.pop %v27
    %v29 = vadd.f32 %v26, 1.0
    %v30 = vadd.f32 %v28, 1.0
    %v31 = vrcp.pop %v29
    %v32 = vmul.f32 1.0, %v31
    %v33 = vrcp.pop %v30
    %v34 = vmul.f32 1.0, %v33
    %35 = vst [vmem:[#allocation5] sm:$0xff] %v32
    %36 = vst [vmem:[#allocation5 + $0x8] sm:$0xff] %v34
    // Predicated region
    $region10: #{tpu_custom_call.1} parent=1 // pred_check
      _
    $region11: #{tpu_custom_call.1} parent=1 // pred_check_branch
      %38 = sbr.rel (0) target = $region13
    $region12: #{tpu_custom_call.1} parent=1 // pred_region
      %s40 = ssub.s32 256, 256
      %41 = vsyncadd [#allocation4], %s40
      %s43 = sshll.u32 [#allocation5], 4
      %s44 = int_to_ptr.vmem [resolvable:$true] %s43
      %46 = dma.vmem_to_hbm [thread:$0]  %s44, 256, %s1, [#allocation4]
    $region13: #{tpu_custom_call.1} parent=1 // pred_fallthru
      _
    // Predicated region
    $region14: #{tpu_custom_call.1} parent=1 // pred_check
      _
    $region15: #{tpu_custom_call.1} parent=1 // pred_check_branch
      %48 = sbr.rel (0) target = $region17
    $region16: #{tpu_custom_call.1} parent=1 // pred_region
      %49 = dma.done [#allocation4], 256
    $region17: #{tpu_custom_call.1} parent=1 // pred_fallthru
      _
    %50 = vsyncpa [#allocation3], 1
    %51 = vsyncpa [#allocation4], 1

</llo_original>
